<compile_context>
chip_gen: v7x
topology: tpu7x:2x2x1
jax: 0.10.0
libtpu: 0.0.40
codegen_flags: <defaults>
</compile_context>

<pallas_src>
import jax
import jax.numpy as jnp
from jax.experimental import pallas as pl
from jax.experimental.pallas import tpu as pltpu


def mlp_kernel(xT_ref, w1t_ref, b1_ref, w2_ref, b2_ref, out_ref):
    # xT_ref : (F, blk)      VMEM  (batch on lanes)
    # w1t_ref: (nodes, F)    VMEM  (resident across grid steps)
    # b1_ref : (nodes, 1)    VMEM
    # w2_ref : (nodes, 1)    VMEM
    # b2_ref : (1, 1)        SMEM scalar
    # out_ref: (1, blk)      VMEM  (lane-dense store)
    x = xT_ref[...]

    # Layer 1: MXU matmul, f32 accumulation; sigmoid via tanh (EUP slot).
    h = jnp.dot(w1t_ref[...], x, preferred_element_type=jnp.float32) + b1_ref[...]
    h = 0.5 * (jnp.tanh(0.5 * h) + 1.0)

    # Layer 2 (nodes -> 1): keep it off the MXU. Broadcast-multiply by w2 over
    # lanes (VPU) and reduce over the node/sublane axis (XLU).
    o = jnp.sum(h * w2_ref[...], axis=0, keepdims=True) + b2_ref[0, 0]
    out_ref[...] = 0.5 * (jnp.tanh(0.5 * o) + 1.0)


def mlp_forward(x, w1, b1, w2, b2, *, block_b=1024):
    """Forward pass of the PyTorch Model.

    x : (B, 8)       w1: (8, nodes)   b1: (1, nodes)
    w2: (nodes, 1)   b2: (1, 1)       returns (B, 1)

    The batch axis is padded to a multiple of 128 (lane width), mapped to
    lanes, and gridded in blocks of `block_b` columns ("parallel" axis ->
    megacore sharding on v7x, double-buffered DMA on all chips). Weights and
    biases use constant index_maps so they stay VMEM-resident across steps.
    block_b defaults to 1024 (x block = 8*1024*4B = 32 KiB), well inside
    v7x's 64 MiB VMEM even with double buffering.
    """
    B, F = x.shape
    nodes = w1.shape[1]

    B_pad = ((B + 127) // 128) * 128
    blk = min(block_b, B_pad)
    B_pad = ((B_pad + blk - 1) // blk) * blk  # make blk divide B_pad

    # Layout plumbing done once in the wrapper, not in the kernel.
    xT = jnp.zeros((F, B_pad), jnp.float32).at[:, :B].set(x.T)
    w1t = w1.T.astype(jnp.float32)            # (nodes, F)
    b1c = b1.reshape(nodes, 1).astype(jnp.float32)
    w2c = w2.reshape(nodes, 1).astype(jnp.float32)
    b2s = b2.reshape(1, 1).astype(jnp.float32)

    grid = (B_pad // blk,)
    out = pl.pallas_call(
        mlp_kernel,
        out_shape=jax.ShapeDtypeStruct((1, B_pad), jnp.float32),
        grid=grid,
        in_specs=[
            pl.BlockSpec((F, blk), lambda i: (0, i)),        # x block, pipelined
            pl.BlockSpec((nodes, F), lambda i: (0, 0)),      # W1^T, resident
            pl.BlockSpec((nodes, 1), lambda i: (0, 0)),      # b1,   resident
            pl.BlockSpec((nodes, 1), lambda i: (0, 0)),      # w2,   resident
            pl.BlockSpec(memory_space=pltpu.MemorySpace.SMEM),  # b2 scalar
        ],
        out_specs=pl.BlockSpec((1, blk), lambda i: (0, i)),
        compiler_params=pltpu.CompilerParams(
            dimension_semantics=("parallel",),
        ),
    )(xT, w1t, b1c, w2c, b2s)

    # Back to the PyTorch-compatible (B, 1) shape.
    return out[:, :B].T


def init_params(key, in_features=8, nodes=32):
    """Deterministic PyTorch-style Linear init (uniform +/- 1/sqrt(fan_in))."""
    k1, k2, k3, k4 = jax.random.split(key, 4)
    bound1 = 1.0 / jnp.sqrt(in_features)
    bound2 = 1.0 / jnp.sqrt(nodes)
    w1 = jax.random.uniform(k1, (in_features, nodes), jnp.float32, -bound1, bound1)
    b1 = jax.random.uniform(k2, (1, nodes), jnp.float32, -bound1, bound1)
    w2 = jax.random.uniform(k3, (nodes, 1), jnp.float32, -bound2, bound2)
    b2 = jax.random.uniform(k4, (1, 1), jnp.float32, -bound2, bound2)
    return w1, b1, w2, b2


if __name__ == "__main__":
    key = jax.random.PRNGKey(0)
    kx, kp = jax.random.split(key)

    batch, in_features, nodes = 8, 8, 32

    # Mimic the notebook's bias-column concat: 7 data features + a ones column.
    x_data = jax.random.normal(kx, (batch, in_features - 1), jnp.float32)
    x = jnp.concatenate([x_data, jnp.ones((batch, 1), jnp.float32)], axis=1)

    w1, b1, w2, b2 = init_params(kp, in_features, nodes)

    out = mlp_forward(x, w1, b1, w2, b2)
    jax.block_until_ready(out)

    # Pure-JAX reference of the same forward pass (original layout).
    h_ref = jax.nn.sigmoid(x @ w1 + b1)
    o_ref = jax.nn.sigmoid(h_ref @ w2 + b2)
    assert out.shape == (batch, 1)
    assert jnp.allclose(out, o_ref, atol=1e-5), "mismatch vs reference"

    print("KERNEL_OK")
</pallas_src>

<mosaic_0001>
module attributes {stable_mosaic.version = 11 : i64} {
  func.func @mlp_kernel(%arg0: i32, %arg1: memref<8x128xf32, #tpu.memory_space<vmem>>, %arg2: memref<32x8xf32, #tpu.memory_space<vmem>>, %arg3: memref<32x1xf32, #tpu.memory_space<vmem>>, %arg4: memref<32x1xf32, #tpu.memory_space<vmem>>, %arg5: memref<1x1xf32, #tpu.memory_space<smem>>, %arg6: memref<1x128xf32, #tpu.memory_space<vmem>>) attributes {dimension_semantics = [#tpu.dimension_semantics<parallel>], iteration_bounds = array<i64: 1>, scalar_prefetch = 0 : i64, scratch_operands = 0 : i64, tpu.core_type = #tpu.core_type<tc>, window_params = [{transform_indices = @transform_0, window_bounds = array<i64: 8, 128>}, {pipeline_mode = #tpu.pipeline_mode<synchronous>, transform_indices = @transform_1, window_bounds = array<i64: 32, 8>}, {pipeline_mode = #tpu.pipeline_mode<synchronous>, transform_indices = @transform_2, window_bounds = array<i64: 32, 1>}, {pipeline_mode = #tpu.pipeline_mode<synchronous>, transform_indices = @transform_3, window_bounds = array<i64: 32, 1>}, {transform_indices = @transform_4, window_bounds = array<i64: 1, 1>}, {transform_indices = @transform_5, window_bounds = array<i64: 1, 128>}]} {
    %c0 = arith.constant 0 : index
    %c0_0 = arith.constant 0 : index
    %0 = vector.load %arg1[%c0, %c0_0] : memref<8x128xf32, #tpu.memory_space<vmem>>, vector<8x128xf32>
    %c0_1 = arith.constant 0 : index
    %c0_2 = arith.constant 0 : index
    %1 = vector.load %arg2[%c0_1, %c0_2] : memref<32x8xf32, #tpu.memory_space<vmem>>, vector<32x8xf32>
    %cst = arith.constant dense<0.000000e+00> : vector<32x128xf32>
    %2 = tpu.matmul %1, %0, %cst {dimension_numbers = #tpu.dot_dimension_numbers<[1], [0], [0], [1], [0, 0, 1, 1], [], []>} : vector<32x8xf32>, vector<8x128xf32>, vector<32x128xf32> -> vector<32x128xf32>
    %c0_3 = arith.constant 0 : index
    %c0_4 = arith.constant 0 : index
    %3 = vector.load %arg3[%c0_3, %c0_4] : memref<32x1xf32, #tpu.memory_space<vmem>>, vector<32x1xf32>
    %4 = vector.broadcast %3 : vector<32x1xf32> to vector<32x128xf32>
    %5 = arith.addf %2, %4 : vector<32x128xf32>
    %cst_5 = arith.constant 5.000000e-01 : f32
    %6 = vector.broadcast %cst_5 : f32 to vector<32x128xf32>
    %7 = arith.mulf %6, %5 : vector<32x128xf32>
    %8 = math.tanh %7 : vector<32x128xf32>
    %cst_6 = arith.constant 1.000000e+00 : f32
    %9 = vector.broadcast %cst_6 : f32 to vector<32x128xf32>
    %10 = arith.addf %8, %9 : vector<32x128xf32>
    %cst_7 = arith.constant 5.000000e-01 : f32
    %11 = vector.broadcast %cst_7 : f32 to vector<32x128xf32>
    %12 = arith.mulf %11, %10 : vector<32x128xf32>
    %c0_8 = arith.constant 0 : index
    %c0_9 = arith.constant 0 : index
    %13 = vector.load %arg4[%c0_8, %c0_9] : memref<32x1xf32, #tpu.memory_space<vmem>>, vector<32x1xf32>
    %14 = vector.broadcast %13 : vector<32x1xf32> to vector<32x128xf32>
    %15 = arith.mulf %12, %14 : vector<32x128xf32>
    %cst_10 = arith.constant dense<0.000000e+00> : vector<128xf32>
    %16 = vector.multi_reduction <add>, %15, %cst_10 [0] : vector<32x128xf32> to vector<128xf32>
    %17 = vector.shape_cast %16 : vector<128xf32> to vector<1x128xf32>
    %c0_11 = arith.constant 0 : index
    %c0_12 = arith.constant 0 : index
    %18 = memref.load %arg5[%c0_11, %c0_12] : memref<1x1xf32, #tpu.memory_space<smem>>
    %19 = vector.broadcast %18 : f32 to vector<1x128xf32>
    %20 = arith.addf %17, %19 : vector<1x128xf32>
    %cst_13 = arith.constant 5.000000e-01 : f32
    %21 = vector.broadcast %cst_13 : f32 to vector<1x128xf32>
    %22 = arith.mulf %21, %20 : vector<1x128xf32>
    %23 = math.tanh %22 : vector<1x128xf32>
    %cst_14 = arith.constant 1.000000e+00 : f32
    %24 = vector.broadcast %cst_14 : f32 to vector<1x128xf32>
    %25 = arith.addf %23, %24 : vector<1x128xf32>
    %cst_15 = arith.constant 5.000000e-01 : f32
    %26 = vector.broadcast %cst_15 : f32 to vector<1x128xf32>
    %27 = arith.mulf %26, %25 : vector<1x128xf32>
    %c0_16 = arith.constant 0 : index
    %c0_17 = arith.constant 0 : index
    %28 = vector.load %arg6[%c0_16, %c0_17] : memref<1x128xf32, #tpu.memory_space<vmem>>, vector<1x128xf32>
    tpu.vector_store %arg6[%c0_16, %c0_17], %27 {strides = array<i32>} : memref<1x128xf32, #tpu.memory_space<vmem>>, vector<1x128xf32>,
    return
  }
  func.func @transform_0(%arg0: i32) -> (i32, i32) {
    %c0_i32 = arith.constant 0 : i32
    %c0_i32_0 = arith.constant 0 : i32
    return %c0_i32, %arg0 : i32, i32
  }
  func.func @transform_1(%arg0: i32) -> (i32, i32) {
    %c0_i32 = arith.constant 0 : i32
    %c0_i32_0 = arith.constant 0 : i32
    %c0_i32_1 = arith.constant 0 : i32
    return %c0_i32, %c0_i32_0 : i32, i32
  }
  func.func @transform_2(%arg0: i32) -> (i32, i32) {
    %c0_i32 = arith.constant 0 : i32
    %c0_i32_0 = arith.constant 0 : i32
    %c0_i32_1 = arith.constant 0 : i32
    return %c0_i32, %c0_i32_0 : i32, i32
  }
  func.func @transform_3(%arg0: i32) -> (i32, i32) {
    %c0_i32 = arith.constant 0 : i32
    %c0_i32_0 = arith.constant 0 : i32
    %c0_i32_1 = arith.constant 0 : i32
    return %c0_i32, %c0_i32_0 : i32, i32
  }
  func.func @transform_4(%arg0: i32) -> (i32, i32) {
    %c0_i32 = arith.constant 0 : i32
    %c0_i32_0 = arith.constant 0 : i32
    %c0_i32_1 = arith.constant 0 : i32
    return %c0_i32, %c0_i32_0 : i32, i32
  }
  func.func @transform_5(%arg0: i32) -> (i32, i32) {
    %c0_i32 = arith.constant 0 : i32
    %c0_i32_0 = arith.constant 0 : i32
    return %c0_i32, %arg0 : i32, i32
  }
}

</mosaic_0001>

<llo_original>
// kernel: tpu_custom_call.1
$region0: #{tpu_custom_call.1}
  #allocation0 [shape = 'u32[]', space=smem, size = 0x4, offset = 0x4, fixed_abs, tag = 'smem constant byte address 0x4 - core index']
  #allocation1 [shape = 'u32[144,128]{1,0:T(1,128)}', space=vmem, size = 0x12000, scoped, tag = 'internal scratch']
  #allocation2 [shape = 'f32[1,1]{1,0:T(1,128)S(6)}', space=smem, size = 0x200, scoped, tag = 'scoped memory for tpu_custom_call.1']
  %s0 = inlined_call_operand.vmem [shape: f32[8,128], index: 0, kind: input, shape index: {}]
  %s1 = inlined_call_operand.vmem [shape: f32[32,8], index: 1, kind: input, shape index: {}]
  %s2 = inlined_call_operand.vmem [shape: f32[32,1], index: 2, kind: input, shape index: {}]
  %s3 = inlined_call_operand.vmem [shape: f32[32,1], index: 3, kind: input, shape index: {}]
  %s4 = inlined_call_operand.<no memory space> [shape: f32[1,1], index: 4, kind: input, shape index: {}]
  %s5 = inlined_call_operand.hbm [shape: f32[1,128], index: 5, kind: output, shape index: {}]
  %s6 = sld [smem:[#allocation0]]
  $region30: #{tpu_custom_call.1} parent=0
    _
  %s8 = ssub.s32 1, %s6
  %s9 = scalar_select 0, %s8, %s6
  %10 = sst [smem:[#allocation2]] %s4
  $region1: #{tpu_custom_call.1} parent=0
    #allocation3 [shape = 'u8[512]{0}', space=vmem, size = 0x400, scoped, tag = 'output window, operand 0, single buffered']
    #allocation4 [shape = 's32[1]{0}', space=sflag, size = 0x4, scoped, tag = 'scoped memory for tpu_custom_call.1']
    %11 = vsyncpa [#allocation4], 0
    // Predicated region
    $region2: #{tpu_custom_call.1} parent=1 // pred_check
      _
    $region3: #{tpu_custom_call.1} parent=1 // pred_check_branch
      %13 = sbr.rel (0) target = $region5
    $region4: #{tpu_custom_call.1} parent=1 // pred_region
      _
    $region5: #{tpu_custom_call.1} parent=1 // pred_fallthru
      _
    // Predicated region
    $region6: #{tpu_custom_call.1} parent=1 // pred_check
      _
    $region7: #{tpu_custom_call.1} parent=1 // pred_check_branch
      %15 = sbr.rel (0) target = $region9
    $region8: #{tpu_custom_call.1} parent=1 // pred_region
      _
    $region9: #{tpu_custom_call.1} parent=1 // pred_fallthru
      _
    // Predicated region
    $region10: #{tpu_custom_call.1} parent=1 // pred_check
      _
    $region11: #{tpu_custom_call.1} parent=1 // pred_check_branch
      %17 = sbr.rel (0) target = $region13
    $region12: #{tpu_custom_call.1} parent=1 // pred_region
      _
    $region13: #{tpu_custom_call.1} parent=1 // pred_fallthru
      _
    // Predicated region
    $region14: #{tpu_custom_call.1} parent=1 // pred_check
      _
    $region15: #{tpu_custom_call.1} parent=1 // pred_check_branch
      %19 = sbr.rel (0) target = $region17
    $region16: #{tpu_custom_call.1} parent=1 // pred_region
      _
    $region17: #{tpu_custom_call.1} parent=1 // pred_fallthru
      _
    // Predicated region
    $region18: #{tpu_custom_call.1} parent=1 // pred_check
      _
    $region19: #{tpu_custom_call.1} parent=1 // pred_check_branch
      %21 = sbr.rel (0) target = $region21
    $region20: #{tpu_custom_call.1} parent=1 // pred_region
      _
    $region21: #{tpu_custom_call.1} parent=1 // pred_fallthru
      _
    %v22 = vld [vmem:[%s0] sm:$0xff]
    %v23 = vld [vmem:[%s1] sm:$0xff]
    %v24 = vld [vmem:[%s1 + $0x8] sm:$0xff]
    %v25 = vld [vmem:[%s1 + $0x10] sm:$0xff]
    %v26 = vld [vmem:[%s1 + $0x18] sm:$0xff]
    %v27 = vld [vmem:[%s2] sm:$0xff]
    %v28 = vld [vmem:[%s2 + $0x8] sm:$0xff]
    %v29 = vld [vmem:[%s2 + $0x10] sm:$0xff]
    %v30 = vld [vmem:[%s2 + $0x18] sm:$0xff]
    %32 = vset.pattern.permute.xlu0 0
    %33 = vperm.xlu0 %32, %v27
    %v34 = vpop.permute.xlu0 %33
    %37 = vset.pattern.permute.xlu0 0
    %38 = vperm.xlu0 %37, %v28
    %v39 = vpop.permute.xlu0 %38
    %42 = vset.pattern.permute.xlu0 0
    %43 = vperm.xlu0 %42, %v29
    %v44 = vpop.permute.xlu0 %43
    %47 = vset.pattern.permute.xlu0 0
    %48 = vperm.xlu0 %47, %v30
    %v49 = vpop.permute.xlu0 %48
    %vm51 = vcmask 64512
    %v53 = vsel %vm51, %v23, 0
    %v56 = vsel %vm51, %v24, 0
    %v59 = vsel %vm51, %v25, 0
    %v62 = vsel %vm51, %v26, 0
    %64 = vmatprep.subr.mxu0 0.0
    %65 = vmatpush1.msra.mxu0 %v22
    %66 = vmatprep.subr.mxu0 0.0
    %67 = vmatpush1.msra.mxu0 0.0
    %68 = vmatprep.subr.mxu0 0.0
    %69 = vmatpush1.msra.mxu0 0.0
    %70 = vmatprep.subr.mxu0 0.0
    %71 = vmatpush1.msra.mxu0 0.0
    %72 = vmatprep.subr.mxu0 0.0
    %73 = vmatpush1.msra.mxu0 0.0
    %74 = vmatprep.subr.mxu0 0.0
    %75 = vmatpush1.msra.mxu0 0.0
    %76 = vmatprep.subr.mxu0 0.0
    %77 = vmatpush1.msra.mxu0 0.0
    %78 = vmatprep.subr.mxu0 0.0
    %79 = vmatpush1.msra.mxu0 0.0
    %80 = vmatprep.subr.mxu0 0.0
    %81 = vmatpush1.msra.mxu0 0.0
    %82 = vmatprep.subr.mxu0 0.0
    %83 = vmatpush1.msra.mxu0 0.0
    %84 = vmatprep.subr.mxu0 0.0
    %85 = vmatpush1.msra.mxu0 0.0
    %86 = vmatprep.subr.mxu0 0.0
    %87 = vmatpush1.msra.mxu0 0.0
    %88 = vmatprep.subr.mxu0 0.0
    %89 = vmatpush1.msra.mxu0 0.0
    %90 = vmatprep.subr.mxu0 0.0
    %91 = vmatpush1.msra.mxu0 0.0
    %92 = vmatprep.subr.mxu0 0.0
    %93 = vmatpush1.msra.mxu0 0.0
    %94 = vmatprep.subr.mxu0 0.0
    %95 = vmatpush1.msra.mxu0 0.0
    %96 = vmatprep.subr.mxu0 0.0
    %97 = vmatpush1.msra.mxu0 0.0
    %98 = vmatprep.subr.mxu0 0.0
    %99 = vmatpush1.msra.mxu0 0.0
    %100 = vmatprep.subr.mxu0 0.0
    %101 = vmatpush1.msra.mxu0 0.0
    %102 = vmatprep.subr.mxu0 0.0
    %103 = vmatpush1.msra.mxu0 0.0
    %104 = vmatprep.subr.mxu0 0.0
    %105 = vmatpush1.msra.mxu0 0.0
    %106 = vmatprep.subr.mxu0 0.0
    %107 = vmatpush1.msra.mxu0 0.0
    %108 = vmatprep.subr.mxu0 0.0
    %109 = vmatpush1.msra.mxu0 0.0
    %110 = vmatprep.subr.mxu0 0.0
    %111 = vmatpush1.msra.mxu0 0.0
    %112 = vmatprep.subr.mxu0 0.0
    %113 = vmatpush1.msra.mxu0 0.0
    %114 = vmatprep.subr.mxu0 0.0
    %115 = vmatpush1.msra.mxu0 0.0
    %116 = vmatprep.subr.mxu0 0.0
    %117 = vmatpush1.msra.mxu0 0.0
    %118 = vmatprep.subr.mxu0 0.0
    %119 = vmatpush1.msra.mxu0 0.0
    %120 = vmatprep.subr.mxu0 0.0
    %121 = vmatpush1.msra.mxu0 0.0
    %122 = vmatprep.subr.mxu0 0.0
    %123 = vmatpush1.msra.mxu0 0.0
    %124 = vmatprep.subr.mxu0 0.0
    %125 = vmatpush1.msra.mxu0 0.0
    %126 = vmatprep.subr.mxu0 0.0
    %127 = vmatpush1.msra.mxu0 0.0
    %128 = vmatprep.mubr.f32.mxu0 0.0
    %129 = vmatmul.mubr.f32.gmra.mrb[0].mxu0 %v53
    %v130 = vpop.f32.mrb[0].mxu0
    %v131 = vadd.f32 %v34, %v130
    %v132 = vpop.f32.mrb[0].mxu0
    %133 = vmatprep.mubr.f32.mxu0 0.0
    %134 = vmatmul.mubr.f32.gmra.mrb[0].mxu0 %v56
    %v135 = vpop.f32.mrb[0].mxu0
    %v136 = vadd.f32 %v39, %v135
    %v137 = vpop.f32.mrb[0].mxu0
    %138 = vmatprep.mubr.f32.mxu0 0.0
    %139 = vmatmul.mubr.f32.gmra.mrb[0].mxu0 %v59
    %v140 = vpop.f32.mrb[0].mxu0
    %v141 = vadd.f32 %v44, %v140
    %v142 = vpop.f32.mrb[0].mxu0
    %143 = vmatprep.mubr.f32.mxu0 0.0
    %144 = vmatmul.mubr.f32.gmra.mrb[0].mxu0 %v62
    %v145 = vpop.f32.mrb[0].mxu0
    %v146 = vadd.f32 %v49, %v145
    %v147 = vpop.f32.mrb[0].mxu0
    %148 = vdwg.mxu0
    %v149 = vmul.f32 %v131, 0.5
    %v150 = vmul.f32 %v136, 0.5
    %v151 = vmul.f32 %v141, 0.5
    %v152 = vmul.f32 %v146, 0.5
    %v153 = vtanh.pop %v149
    %v154 = vtanh.pop %v150
    %v155 = vtanh.pop %v151
    %v156 = vtanh.pop %v152
    %v157 = vadd.f32 %v153, 1.0
    %v158 = vadd.f32 %v154, 1.0
    %v159 = vadd.f32 %v155, 1.0
    %v160 = vadd.f32 %v156, 1.0
    %v161 = vmul.f32 %v157, 0.5
    %v162 = vmul.f32 %v158, 0.5
    %v163 = vmul.f32 %v159, 0.5
    %v164 = vmul.f32 %v160, 0.5
    %v165 = vld [vmem:[%s3] sm:$0xff]
    %v166 = vld [vmem:[%s3 + $0x8] sm:$0xff]
    %v167 = vld [vmem:[%s3 + $0x10] sm:$0xff]
    %v168 = vld [vmem:[%s3 + $0x18] sm:$0xff]
    %170 = vset.pattern.permute.xlu0 0
    %171 = vperm.xlu0 %170, %v165
    %v172 = vpop.permute.xlu0 %171
    %175 = vset.pattern.permute.xlu0 0
    %176 = vperm.xlu0 %175, %v166
    %v177 = vpop.permute.xlu0 %176
    %180 = vset.pattern.permute.xlu0 0
    %181 = vperm.xlu0 %180, %v167
    %v182 = vpop.permute.xlu0 %181
    %185 = vset.pattern.permute.xlu0 0
    %186 = vperm.xlu0 %185, %v168
    %v187 = vpop.permute.xlu0 %186
    %v189 = vmul.f32 %v161, %v172
    %v190 = vmul.f32 %v162, %v177
    %v191 = vmul.f32 %v163, %v182
    %v192 = vmul.f32 %v164, %v187
    %v193 = vadd.f32 %v189, %v190
    %v194 = vadd.f32 %v193, %v191
    %v195 = vadd.f32 %v194, %v192
    %v196 = vrot.slane %v195, 4
    %v197 = vadd.f32 %v195, %v196
    %v198 = vrot.slane %v197, 2
    %v199 = vadd.f32 %v197, %v198
    %v200 = vrot.slane %v199, 1
    %v201 = vadd.f32 %v199, %v200
    %s202 = sld [smem:[#allocation2]]
    %v203 = vstv %s202
    %v204 = vadd.f32 %v201, %v203
    %v205 = vmul.f32 %v204, 0.5
    %v206 = vtanh.pop %v205
    %v207 = vadd.f32 %v206, 1.0
    %v208 = vmul.f32 %v207, 0.5
    %209 = vst [vmem:[#allocation3] sm:$0x1] %v208
    // Predicated region
    $region22: #{tpu_custom_call.1} parent=1 // pred_check
      _
    $region23: #{tpu_custom_call.1} parent=1 // pred_check_branch
      %211 = sbr.rel (0) target = $region25
    $region24: #{tpu_custom_call.1} parent=1 // pred_region
      %s213 = ssub.s32 16, 16
      %214 = vsyncadd [#allocation4], %s213
      %s216 = sshll.u32 [#allocation3], 4
      %s217 = int_to_ptr.vmem [resolvable:$true] %s216
      %219 = dma.vmem_to_hbm [thread:$0]  %s217, 16, %s5, [#allocation4]
    $region25: #{tpu_custom_call.1} parent=1 // pred_fallthru
      _
    // Predicated region
    $region26: #{tpu_custom_call.1} parent=1 // pred_check
      _
    $region27: #{tpu_custom_call.1} parent=1 // pred_check_branch
      %221 = sbr.rel (0) target = $region29
    $region28: #{tpu_custom_call.1} parent=1 // pred_region
      %222 = dma.done [#allocation4], 16
    $region29: #{tpu_custom_call.1} parent=1 // pred_fallthru
      _
    %223 = vsyncpa [#allocation4], 1

</llo_original>
